<compile_context>
chip_gen: v5e
topology: v5e:2x2
jax: 0.10.0
libtpu: 0.0.40
codegen_flags: <defaults>
</compile_context>

<pallas_src>
import jax
import jax.numpy as jnp
from jax import lax
from jax.experimental import pallas as pl
from jax.experimental.pallas import tpu as pltpu

FEATURES = 100       # logical in/out features of nn.Linear(100, 100)
FEATURES_PAD = 128   # lane-aligned feature width
TILE_CAP = 1024      # max rows per grid step


def _round_up(x, m):
    return ((x + m - 1) // m) * m


def _cdiv(a, b):
    return -(-a // b)


def choose_tiling(batch):
    """Pick (tile_b, padded_batch) for a logical batch size.

    Splits the 8-aligned batch evenly into n_steps tiles so pad waste stays
    small, caps tiles at TILE_CAP rows, and forces >= 2 steps for B > 16 so
    v7x's two TensorCores each get a batch shard.
    """
    b8 = _round_up(max(batch, 8), 8)
    n_steps = _cdiv(b8, TILE_CAP)
    if b8 > 16:
        n_steps = max(n_steps, 2)      # v7x: one shard per TensorCore
    tile_b = _round_up(_cdiv(b8, n_steps), 8)
    n_steps = _cdiv(b8, tile_b)
    return tile_b, n_steps * tile_b


def pad_weight(weight):
    """One-time at parameter init: (100,100) torch-layout -> (128,128), zero pad."""
    assert weight.shape == (FEATURES, FEATURES)
    return jnp.pad(
        weight, ((0, FEATURES_PAD - FEATURES), (0, FEATURES_PAD - FEATURES))
    )


def pad_activations(z, padded_batch):
    """One-time at data creation: (B,100) -> (padded_batch,128), zero pad."""
    B, f_in = z.shape
    assert f_in == FEATURES and padded_batch >= B
    return jnp.pad(z, ((0, padded_batch - B), (0, FEATURES_PAD - FEATURES)))


def _linear_kernel(z_ref, w_ref, o_ref):
    # z_ref: (tile_b, 128) VMEM
    # w_ref: (128, 128)    VMEM, torch layout (out_features, in_features), padded
    # o_ref: (tile_b, 128) VMEM
    # out[b, o] = sum_i z[b, i] * w[o, i]  ==  z @ W.T, native on the MXU.
    o_ref[...] = lax.dot_general(
        z_ref[...],
        w_ref[...],
        dimension_numbers=(((1,), (1,)), ((), ())),
        preferred_element_type=jnp.float32,
    )


def generator_forward(z_p, w_p, *, tile_b):
    """Forward pass on pre-padded operands. No wrapper copies.

    z_p: (padded_batch, 128) float32, padded_batch % tile_b == 0
    w_p: (128, 128) float32 (torch layout, zero-padded)
    returns: (padded_batch, 128) float32 (columns 100..127 are zero)
    """
    b_pad, f_pad = z_p.shape
    assert f_pad == FEATURES_PAD and w_p.shape == (FEATURES_PAD, FEATURES_PAD)
    assert b_pad % tile_b == 0
    n_steps = b_pad // tile_b

    itemsize = jnp.dtype(z_p.dtype).itemsize
    cost = pl.CostEstimate(
        flops=2 * b_pad * FEATURES_PAD * FEATURES_PAD,
        transcendentals=0,
        bytes_accessed=(z_p.size + w_p.size + b_pad * FEATURES_PAD) * itemsize,
    )

    return pl.pallas_call(
        _linear_kernel,
        out_shape=jax.ShapeDtypeStruct((b_pad, FEATURES_PAD), jnp.float32),
        grid=(n_steps,),
        in_specs=[
            pl.BlockSpec((tile_b, FEATURES_PAD), lambda i: (i, 0)),
            # Weight stays VMEM-resident across all batch tiles.
            pl.BlockSpec((FEATURES_PAD, FEATURES_PAD), lambda i: (0, 0)),
        ],
        out_specs=pl.BlockSpec((tile_b, FEATURES_PAD), lambda i: (i, 0)),
        compiler_params=pltpu.CompilerParams(
            dimension_semantics=("parallel",),
        ),
        cost_estimate=cost,
    )(z_p, w_p)


if __name__ == "__main__":
    key = jax.random.PRNGKey(0)

    # Deterministic parameter init exactly as in the module's __init__:
    #   self.model.weight.data = torch.eye(100)
    weight = jnp.eye(FEATURES, FEATURES, dtype=jnp.float32)
    # Hoisted, one-time weight pad (parameter init).
    w_p = pad_weight(weight)

    # --- small batch (single-tile grid) --------------------------------------
    B = 8
    z = jax.random.normal(key, (B, FEATURES), dtype=jnp.float32)
    tile_b, padded_b = choose_tiling(B)
    z_p = pad_activations(z, padded_b)           # one-time pad at data creation

    fwd = jax.jit(lambda zz, ww: generator_forward(zz, ww, tile_b=tile_b))
    img_p = fwd(z_p, w_p)
    jax.block_until_ready(img_p)

    img = img_p[:B, :FEATURES]                   # slice only for the check
    assert img.shape == (B, FEATURES)
    assert jnp.allclose(img, z, atol=1e-5)       # identity weight => output == input

    # --- slightly larger batch (exercises the multi-step / megacore grid) ----
    B2 = 40
    z2 = jax.random.normal(jax.random.PRNGKey(1), (B2, FEATURES), dtype=jnp.float32)
    tile_b2, padded_b2 = choose_tiling(B2)       # 2 steps for v7x megacore
    z2_p = pad_activations(z2, padded_b2)

    fwd2 = jax.jit(lambda zz, ww: generator_forward(zz, ww, tile_b=tile_b2))
    img2_p = fwd2(z2_p, w_p)
    jax.block_until_ready(img2_p)
    assert jnp.allclose(img2_p[:B2, :FEATURES], z2, atol=1e-5)

    print("KERNEL_OK")
</pallas_src>

<mosaic_0001>
module attributes {stable_mosaic.version = 11 : i64} {
  func.func @_linear_kernel(%arg0: i32, %arg1: memref<8x128xf32, #tpu.memory_space<vmem>>, %arg2: memref<128x128xf32, #tpu.memory_space<vmem>>, %arg3: memref<8x128xf32, #tpu.memory_space<vmem>>) attributes {dimension_semantics = [#tpu.dimension_semantics<parallel>], iteration_bounds = array<i64: 1>, scalar_prefetch = 0 : i64, scratch_operands = 0 : i64, tpu.core_type = #tpu.core_type<tc>, window_params = [{transform_indices = @transform_0, window_bounds = array<i64: 8, 128>}, {pipeline_mode = #tpu.pipeline_mode<synchronous>, transform_indices = @transform_1, window_bounds = array<i64: 128, 128>}, {transform_indices = @transform_2, window_bounds = array<i64: 8, 128>}]} {
    %c0 = arith.constant 0 : index
    %c0_0 = arith.constant 0 : index
    %0 = vector.load %arg1[%c0, %c0_0] : memref<8x128xf32, #tpu.memory_space<vmem>>, vector<8x128xf32>
    %c0_1 = arith.constant 0 : index
    %c0_2 = arith.constant 0 : index
    %1 = vector.load %arg2[%c0_1, %c0_2] : memref<128x128xf32, #tpu.memory_space<vmem>>, vector<128x128xf32>
    %cst = arith.constant dense<0.000000e+00> : vector<8x128xf32>
    %2 = tpu.matmul %0, %1, %cst {dimension_numbers = #tpu.dot_dimension_numbers<[1], [1], [0], [0], [0, 0, 1, 0], [], []>} : vector<8x128xf32>, vector<128x128xf32>, vector<8x128xf32> -> vector<8x128xf32>
    %c0_3 = arith.constant 0 : index
    %c0_4 = arith.constant 0 : index
    %3 = vector.load %arg3[%c0_3, %c0_4] : memref<8x128xf32, #tpu.memory_space<vmem>>, vector<8x128xf32>
    tpu.vector_store %arg3[%c0_3, %c0_4], %2 {strides = array<i32>} : memref<8x128xf32, #tpu.memory_space<vmem>>, vector<8x128xf32>,
    return
  }
  func.func @transform_0(%arg0: i32) -> (i32, i32) {
    %c0_i32 = arith.constant 0 : i32
    %c0_i32_0 = arith.constant 0 : i32
    return %arg0, %c0_i32 : i32, i32
  }
  func.func @transform_1(%arg0: i32) -> (i32, i32) {
    %c0_i32 = arith.constant 0 : i32
    %c0_i32_0 = arith.constant 0 : i32
    %c0_i32_1 = arith.constant 0 : i32
    return %c0_i32, %c0_i32_0 : i32, i32
  }
  func.func @transform_2(%arg0: i32) -> (i32, i32) {
    %c0_i32 = arith.constant 0 : i32
    %c0_i32_0 = arith.constant 0 : i32
    return %arg0, %c0_i32 : i32, i32
  }
}

</mosaic_0001>

<llo_original>
// kernel: _lambda_.1
$region0: #{_lambda_.1}
  #allocation0 [shape = 'u32[]', space=smem, size = 0x4, offset = 0x4, fixed_abs, tag = 'smem constant byte address 0x4 - core index']
  #allocation1 [shape = 'u32[72,128]{1,0:T(1,128)}', space=vmem, size = 0x9000, scoped, tag = 'internal scratch']
  %s0 = inlined_call_operand.hbm [shape: f32[8,128], index: 0, kind: input, shape index: {}]
  %s1 = inlined_call_operand.hbm [shape: f32[128,128], index: 1, kind: input, shape index: {}]
  %s2 = inlined_call_operand.hbm [shape: f32[8,128], index: 2, kind: output, shape index: {}]
  %s3 = sld [smem:[#allocation0]]
  $region26: #{_lambda_.1} parent=0
    _
  %s5 = ssub.s32 1, %s3
  %s6 = scalar_select 0, %s5, %s3
  $region1: #{_lambda_.1} parent=0
    #allocation2 [shape = 'u8[4096]{0}', space=vmem, size = 0x1000, scoped, tag = 'input window, operand 0, single buffered']
    #allocation3 [shape = 's32[1]{0}', space=sflag, size = 0x4, scoped, tag = 'scoped memory for _lambda_.1']
    #allocation4 [shape = 's32[1]{0}', space=sflag, size = 0x4, scoped, tag = 'scoped memory for _lambda_.1']
    #allocation5 [shape = 'u8[65536]{0}', space=vmem, size = 0x10000, scoped, tag = 'input window, operand 1, single buffered']
    #allocation6 [shape = 's32[1]{0}', space=sflag, size = 0x4, scoped, tag = 'scoped memory for _lambda_.1']
    #allocation7 [shape = 'u8[4096]{0}', space=vmem, size = 0x1000, scoped, tag = 'output window, operand 0, single buffered']
    %7 = vsyncpa [#allocation3], 0
    %8 = vsyncpa [#allocation6], 0
    %9 = vsyncpa [#allocation4], 0
    // Predicated region
    $region2: #{_lambda_.1} parent=1 // pred_check
      _
    $region3: #{_lambda_.1} parent=1 // pred_check_branch
      %11 = sbr.rel (0) target = $region5
    $region4: #{_lambda_.1} parent=1 // pred_region
      %13 = vsyncadd [#allocation3], 0
      %s15 = sshll.u32 %s0, 4
      %s16 = int_to_ptr.hbm [resolvable:$true] %s15
      %s17 = sshll.u32 [#allocation2], 4
      %s18 = int_to_ptr.vmem [resolvable:$true] %s17
      %20 = dma.hbm_to_vmem [thread:$0]  %s16, 128, %s18, [#allocation3]
    $region5: #{_lambda_.1} parent=1 // pred_fallthru
      _
    // Predicated region
    $region6: #{_lambda_.1} parent=1 // pred_check
      _
    $region7: #{_lambda_.1} parent=1 // pred_check_branch
      %22 = sbr.rel (0) target = $region9
    $region8: #{_lambda_.1} parent=1 // pred_region
      %24 = vsyncadd [#allocation6], 0
      %s25 = sshll.u32 %s1, 4
      %s26 = int_to_ptr.hbm [resolvable:$true] %s25
      %s27 = sshll.u32 [#allocation5], 4
      %s28 = int_to_ptr.vmem [resolvable:$true] %s27
      %33 = dma.hbm_to_vmem [thread:$0]  %s26, 2048, %s28, [#allocation6], 128, 128, 8
    $region9: #{_lambda_.1} parent=1 // pred_fallthru
      _
    // Predicated region
    $region10: #{_lambda_.1} parent=1 // pred_check
      _
    $region11: #{_lambda_.1} parent=1 // pred_check_branch
      %35 = sbr.rel (0) target = $region13
    $region12: #{_lambda_.1} parent=1 // pred_region
      %37 = dma.done [#allocation3], 128
    $region13: #{_lambda_.1} parent=1 // pred_fallthru
      _
    // Predicated region
    $region14: #{_lambda_.1} parent=1 // pred_check
      _
    $region15: #{_lambda_.1} parent=1 // pred_check_branch
      %39 = sbr.rel (0) target = $region17
    $region16: #{_lambda_.1} parent=1 // pred_region
      %41 = dma.done [#allocation6], 2048
    $region17: #{_lambda_.1} parent=1 // pred_fallthru
      _
    %v42 = vld [vmem:[#allocation2] sm:$0xff]
    %v43 = vld [vmem:[#allocation5] sm:$0xff]
    %v44 = vld [vmem:[#allocation5 + $0x8] sm:$0xff]
    %v45 = vld [vmem:[#allocation5 + $0x10] sm:$0xff]
    %v46 = vld [vmem:[#allocation5 + $0x18] sm:$0xff]
    %v47 = vld [vmem:[#allocation5 + $0x20] sm:$0xff]
    %v48 = vld [vmem:[#allocation5 + $0x28] sm:$0xff]
    %v49 = vld [vmem:[#allocation5 + $0x30] sm:$0xff]
    %v50 = vld [vmem:[#allocation5 + $0x38] sm:$0xff]
    %v51 = vld [vmem:[#allocation5 + $0x40] sm:$0xff]
    %v52 = vld [vmem:[#allocation5 + $0x48] sm:$0xff]
    %v53 = vld [vmem:[#allocation5 + $0x50] sm:$0xff]
    %v54 = vld [vmem:[#allocation5 + $0x58] sm:$0xff]
    %v55 = vld [vmem:[#allocation5 + $0x60] sm:$0xff]
    %v56 = vld [vmem:[#allocation5 + $0x68] sm:$0xff]
    %v57 = vld [vmem:[#allocation5 + $0x70] sm:$0xff]
    %v58 = vld [vmem:[#allocation5 + $0x78] sm:$0xff]
    %59 = vmatpush.xpose.msra.mxu0 %v58
    %60 = vmatpush.xpose.msra.mxu0 %v57
    %61 = vmatpush.xpose.msra.mxu0 %v56
    %62 = vmatpush.xpose.msra.mxu0 %v55
    %63 = vmatpush.xpose.msra.mxu0 %v54
    %64 = vmatpush.xpose.msra.mxu0 %v53
    %65 = vmatpush.xpose.msra.mxu0 %v52
    %66 = vmatpush.xpose.msra.mxu0 %v51
    %67 = vmatpush.xpose.msra.mxu0 %v50
    %68 = vmatpush.xpose.msra.mxu0 %v49
    %69 = vmatpush.xpose.msra.mxu0 %v48
    %70 = vmatpush.xpose.msra.mxu0 %v47
    %71 = vmatpush.xpose.msra.mxu0 %v46
    %72 = vmatpush.xpose.msra.mxu0 %v45
    %73 = vmatpush.xpose.msra.mxu0 %v44
    %74 = vmatpush.xpose.msra.mxu0 %v43
    %75 = vmatmul.f32.gmra.mxu0 %v42
    %v76 = vpop.f32.mrf.mxu0
    %v77 = vadd.f32 0.0, %v76
    %78 = vdwg.mxu0
    %79 = vst [vmem:[#allocation7] sm:$0xff] %v77
    // Predicated region
    $region18: #{_lambda_.1} parent=1 // pred_check
      _
    $region19: #{_lambda_.1} parent=1 // pred_check_branch
      %81 = sbr.rel (0) target = $region21
    $region20: #{_lambda_.1} parent=1 // pred_region
      %83 = vsyncadd [#allocation4], 0
      %s85 = sshll.u32 [#allocation7], 4
      %s86 = int_to_ptr.vmem [resolvable:$true] %s85
      %s87 = sshll.u32 %s2, 4
      %s88 = int_to_ptr.hbm [resolvable:$true] %s87
      %90 = dma.vmem_to_hbm [thread:$0]  %s86, 128, %s88, [#allocation4]
    $region21: #{_lambda_.1} parent=1 // pred_fallthru
      _
    // Predicated region
    $region22: #{_lambda_.1} parent=1 // pred_check
      _
    $region23: #{_lambda_.1} parent=1 // pred_check_branch
      %92 = sbr.rel (0) target = $region25
    $region24: #{_lambda_.1} parent=1 // pred_region
      %94 = dma.done [#allocation4], 128
    $region25: #{_lambda_.1} parent=1 // pred_fallthru
      _
    %95 = vsyncpa [#allocation3], 1
    %96 = vsyncpa [#allocation6], 1
    %97 = vsyncpa [#allocation4], 1

</llo_original>
